<compile_context>
chip_gen: v7x
topology: tpu7x:2x2x1
jax: 0.10.0
libtpu: 0.0.40
codegen_flags: <defaults>
</compile_context>

<pallas_src>
import functools

import jax
import jax.numpy as jnp
from jax.experimental import pallas as pl
from jax.experimental.pallas import tpu as pltpu


def _round_up(x, m):
    return ((x + m - 1) // m) * m


# ------------------------------- fused kernel ------------------------------- #

def _fused_kernel(p_ref, w_ref, s_ref, b_ref, lw_ref, lb_ref, o_ref,
                  sum_ref, max_ref, *, hw, row_tile, nb, ragged):
    # p_ref : [Nb, row_tile, Kpad] bf16 im2col patches (Nb whole images, row-tile j)
    # w_ref : [Kpad, Cpad] bf16 conv weight ; s/b_ref : [1, Cpad] folded-BN scale/bias (f32)
    # lw_ref: [Cpad, Dpad] last_linear weight^T ; lb_ref : [1, Dpad] bias
    # o_ref : [Nb, Dpad] normalized embeddings of this image block
    # sum_ref/max_ref : [Nb, Cpad] per-image running pooling accumulators (VMEM scratch)
    j = pl.program_id(1)

    @pl.when(j == 0)
    def _init():
        sum_ref[...] = jnp.zeros(sum_ref.shape, jnp.float32)
        max_ref[...] = jnp.full(max_ref.shape, -jnp.inf, jnp.float32)

    rows = nb * row_tile
    kp = p_ref.shape[-1]

    # Conv stem as one big im2col matmul: bf16 operands, f32 accumulation on the MXU.
    p = p_ref[...].reshape(rows, kp)
    acc = jnp.dot(p, w_ref[...], preferred_element_type=jnp.float32)        # [rows, Cpad]
    # Folded frozen-BN + ReLU epilogue in f32 (v5e-safe: no bf16 on the VPU).
    y = jnp.maximum(acc * s_ref[...] + b_ref[...], 0.0)                     # [rows, Cpad]

    # Per-image segment selector: seg[i, r] = 1 iff flat row r belongs to image slot i
    # (and, if ragged, is a real row of that image).  Built without int div/mod.
    row_idx = jax.lax.broadcasted_iota(jnp.int32, (nb, rows), 1)
    acc_idx = jax.lax.broadcasted_iota(jnp.int32, (nb, rows), 0)
    lo = acc_idx * row_tile
    seg = jnp.logical_and(row_idx >= lo, row_idx < lo + row_tile)
    if ragged:
        seg = jnp.logical_and(seg, (row_idx - lo) + j * row_tile < hw)
    seg_f = seg.astype(jnp.float32)

    # Avg-pool channel sums on the MXU (vector-extended slot is otherwise idle here).
    sum_ref[...] += jnp.dot(seg_f, y, preferred_element_type=jnp.float32)   # [Nb, Cpad]

    # Max pooling on the VPU/XLU (mask padded rows only when the tile is truly ragged).
    y_b = y.reshape(nb, row_tile, y.shape[-1])
    if ragged:
        t = jax.lax.broadcasted_iota(jnp.int32, (row_tile, 1), 0)
        valid = (j * row_tile + t) < hw                                     # [row_tile, 1]
        y_b = jnp.where(valid[None, :, :], y_b, -jnp.inf)
    max_ref[...] = jnp.maximum(max_ref[...], jnp.max(y_b, axis=1))

    @pl.when(j == pl.num_programs(1) - 1)
    def _finalize():
        # 'double' pooling: global avg + global max, SUMMED (matches `y += pool_aux(x)`).
        pooled = sum_ref[...] * (1.0 / hw) + max_ref[...]                   # [Nb, Cpad]
        emb = jnp.dot(pooled, lw_ref[...], preferred_element_type=jnp.float32) + lb_ref[...]
        # torch.nn.functional.normalize(dim=-1, p=2, eps=1e-12) via rsqrt (EUP slot).
        # Padded embedding columns are exact zeros, so ssq is unaffected by the padding.
        ssq = jnp.sum(emb * emb, axis=-1, keepdims=True)
        o_ref[...] = emb * jax.lax.rsqrt(jnp.maximum(ssq, 1e-24))


def fused_forward(patches, w_mat, scale, bias, lin_w_t, lin_b, *, hw, row_tile, nb):
    n_pad, hw_pad, kp = patches.shape
    cp = w_mat.shape[1]
    dp = lin_w_t.shape[1]
    n_blocks = n_pad // nb
    n_tiles = hw_pad // row_tile
    ragged = hw_pad != hw
    kernel = functools.partial(_fused_kernel, hw=hw, row_tile=row_tile, nb=nb, ragged=ragged)
    return pl.pallas_call(
        kernel,
        out_shape=jax.ShapeDtypeStruct((n_pad, dp), jnp.float32),
        grid_spec=pltpu.PrefetchScalarGridSpec(
            num_scalar_prefetch=0,
            grid=(n_blocks, n_tiles),
            in_specs=[
                pl.BlockSpec((nb, row_tile, kp), lambda n, j: (n, j, 0)),
                pl.BlockSpec((kp, cp), lambda n, j: (0, 0)),
                pl.BlockSpec((1, cp), lambda n, j: (0, 0)),
                pl.BlockSpec((1, cp), lambda n, j: (0, 0)),
                pl.BlockSpec((cp, dp), lambda n, j: (0, 0)),
                pl.BlockSpec((1, dp), lambda n, j: (0, 0)),
            ],
            out_specs=pl.BlockSpec((nb, dp), lambda n, j: (n, 0)),
            scratch_shapes=[
                pltpu.VMEM((nb, cp), jnp.float32),   # running per-image channel sum
                pltpu.VMEM((nb, cp), jnp.float32),   # running per-image channel max
            ],
        ),
        compiler_params=pltpu.CompilerParams(
            dimension_semantics=("parallel", "arbitrary")),
    )(patches, w_mat, scale, bias, lin_w_t, lin_b)


# ------------------------------ glue (plain JAX) ---------------------------- #

def im2col(x_nhwc, k, stride, pad):
    """Extract conv patches; per-row feature order = (kh, kw, cin). Preserves input dtype."""
    N, H, W, C = x_nhwc.shape
    xp = jnp.pad(x_nhwc, ((0, 0), (pad, pad), (pad, pad), (0, 0)))
    Ho = (H + 2 * pad - k) // stride + 1
    Wo = (W + 2 * pad - k) // stride + 1
    cols = []
    for ki in range(k):
        for kj in range(k):
            cols.append(xp[:, ki:ki + stride * Ho:stride, kj:kj + stride * Wo:stride, :])
    patches = jnp.concatenate(cols, axis=-1)           # [N, Ho, Wo, k*k*C]
    return patches.reshape(N, Ho * Wo, k * k * C), Ho, Wo


def init_params(key, cin, cout, embed_dim, k=3):
    ks = jax.random.split(key, 8)
    conv_w = 0.1 * jax.random.normal(ks[0], (cout, cin, k, k), jnp.float32)   # OIHW (torch)
    conv_b = 0.01 * jax.random.normal(ks[1], (cout,), jnp.float32)
    bn_gamma = 1.0 + 0.1 * jax.random.normal(ks[2], (cout,), jnp.float32)
    bn_beta = 0.1 * jax.random.normal(ks[3], (cout,), jnp.float32)
    bn_mean = 0.1 * jax.random.normal(ks[4], (cout,), jnp.float32)
    bn_var = 0.5 + jax.random.uniform(ks[5], (cout,), jnp.float32)
    lin_w = (1.0 / jnp.sqrt(cout)) * jax.random.normal(ks[6], (embed_dim, cout), jnp.float32)
    lin_b = 0.01 * jax.random.normal(ks[7], (embed_dim,), jnp.float32)

    # Frozen (eval-mode) BN folded into per-channel scale/bias:
    #   y = gamma * (conv(x)+conv_b - mean) / sqrt(var+eps) + beta
    eps = 1e-5
    scale = bn_gamma / jnp.sqrt(bn_var + eps)
    bias = bn_beta + scale * (conv_b - bn_mean)

    # OIHW -> (kh, kw, cin, cout) -> [k*k*cin, cout]
    k_dim = k * k * cin
    k_pad = _round_up(k_dim, 8)
    w_mat = jnp.transpose(conv_w, (2, 3, 1, 0)).reshape(k_dim, cout)          # [27, 64] f32
    lin_w_t = jnp.transpose(lin_w)                                            # [64, 32] f32

    # Lane-dense padding: Cout -> 128, embed -> 128 (zero pads, exact zeros downstream).
    cpad = _round_up(cout, 128)
    dpad = _round_up(embed_dim, 128)

    w_mat_p = jnp.pad(w_mat, ((0, k_pad - k_dim), (0, cpad - cout))).astype(jnp.bfloat16)
    scale_p = jnp.pad(scale, (0, cpad - cout)).reshape(1, cpad)
    bias_p = jnp.pad(bias, (0, cpad - cout)).reshape(1, cpad)
    lin_w_t_p = jnp.pad(lin_w_t, ((0, cpad - cout), (0, dpad - embed_dim)))
    lin_b_p = jnp.pad(lin_b, (0, dpad - embed_dim)).reshape(1, dpad)

    return {
        # kernel operands (lane-padded; conv weight bf16 for the MXU, rest f32)
        "w_mat": w_mat_p,          # [k_pad, cpad] bf16
        "scale": scale_p,          # [1, cpad] f32
        "bias": bias_p,            # [1, cpad] f32
        "lin_w_t": lin_w_t_p,      # [cpad, dpad] f32
        "lin_b": lin_b_p,          # [1, dpad] f32
        # unpadded f32 copies for the pure-JAX reference (also carry the true dims)
        "w_mat_f32": w_mat, "scale_f32": scale, "bias_f32": bias,
        "lin_w_t_f32": lin_w_t, "lin_b_f32": lin_b,
    }


@jax.jit
def network_forward(x_nchw, params):
    # NCHW (torch convention) -> NHWC so channels ride the lane axis; cast to bf16 BEFORE
    # im2col so the 9x-expanded patch tensor and its padding only ever exist in bf16.
    # (Longer-term: do im2col in-kernel via memory_space=pl.ANY DMA of raw NHWC rows.)
    x = jnp.transpose(x_nchw, (0, 2, 3, 1)).astype(jnp.bfloat16)
    patches, _, _ = im2col(x, k=3, stride=2, pad=1)             # [N, HW, 27] bf16
    N, hw, k_dim = patches.shape
    k_pad = params["w_mat"].shape[0]
    d_true = params["lin_w_t_f32"].shape[1]

    # Tiling: pack as many rows as possible per grid step (amortize ~0.35us/step overhead).
    # (ROWS_PER_STEP, 32) bf16 patches = 128 KiB per pipeline buffer plus a
    # (ROWS_PER_STEP, 128) f32 activation -> comfortably inside v7x's 64 MiB VMEM.
    ROWS_PER_STEP = 2048
    hw8 = _round_up(hw, 8)
    if hw8 <= ROWS_PER_STEP:
        row_tile = hw8                                  # whole image per row-tile
        nb = max(1, min(N, ROWS_PER_STEP // hw8))       # batch several images per block
    else:
        row_tile = ROWS_PER_STEP
        nb = 1
    hw_pad = _round_up(hw, row_tile)
    n_pad = _round_up(N, nb)

    patches = jnp.pad(patches,
                      ((0, n_pad - N), (0, hw_pad - hw), (0, k_pad - k_dim)))

    out = fused_forward(patches, params["w_mat"], params["scale"], params["bias"],
                        params["lin_w_t"], params["lin_b"],
                        hw=hw, row_tile=row_tile, nb=nb)
    return out[:N, :d_true]


def reference_forward(x_nchw, params, k=3, stride=2, pad=1):
    """Pure-JAX f32 reference for the same synthetic stem + head."""
    x = jnp.transpose(x_nchw, (0, 2, 3, 1))
    patches, _, _ = im2col(x, k, stride, pad)                   # [N, HW, 27] f32
    y = jnp.maximum((patches @ params["w_mat_f32"]) * params["scale_f32"]
                    + params["bias_f32"], 0.0)                  # [N, HW, C]
    pooled = jnp.mean(y, axis=1) + jnp.max(y, axis=1)           # avg + max ('double')
    emb = pooled @ params["lin_w_t_f32"] + params["lin_b_f32"]
    nrm = jnp.sqrt(jnp.sum(emb * emb, axis=-1, keepdims=True))
    return emb / jnp.maximum(nrm, 1e-12)


# ----------------------------------- main ----------------------------------- #

if __name__ == "__main__":
    key = jax.random.PRNGKey(0)
    k_x, k_p = jax.random.split(key)

    N, Cin, H, W = 2, 3, 32, 32
    Cout, EMBED = 64, 32

    x = jax.random.normal(k_x, (N, Cin, H, W), jnp.float32)     # NCHW, like torch
    params = init_params(k_p, Cin, Cout, EMBED)

    out = jax.block_until_ready(network_forward(x, params))

    assert out.shape == (N, EMBED)
    # normalized embeddings -> unit norm
    norms = jnp.linalg.norm(out, axis=-1)
    assert bool(jnp.all(jnp.abs(norms - 1.0) < 1e-3))
    # numerics vs f32 reference (bf16 input/conv operands, f32 accumulation & epilogue)
    ref = reference_forward(x, params)
    assert bool(jnp.all(jnp.abs(out - ref) < 5e-2)), float(jnp.max(jnp.abs(out - ref)))

    print("KERNEL_OK")
</pallas_src>

<mosaic_0001>
module attributes {stable_mosaic.version = 11 : i64} {
  func.func @_fused_kernel(%arg0: i32, %arg1: i32, %arg2: memref<2x256x32xbf16, #tpu.memory_space<vmem>>, %arg3: memref<32x128xbf16, #tpu.memory_space<vmem>>, %arg4: memref<1x128xf32, #tpu.memory_space<vmem>>, %arg5: memref<1x128xf32, #tpu.memory_space<vmem>>, %arg6: memref<128x128xf32, #tpu.memory_space<vmem>>, %arg7: memref<1x128xf32, #tpu.memory_space<vmem>>, %arg8: memref<2x128xf32, #tpu.memory_space<vmem>>, %arg9: memref<2x128xf32, #tpu.memory_space<vmem>>, %arg10: memref<2x128xf32, #tpu.memory_space<vmem>>) attributes {dimension_semantics = [#tpu.dimension_semantics<parallel>, #tpu.dimension_semantics<arbitrary>], iteration_bounds = array<i64: 1, 1>, scalar_prefetch = 0 : i64, scratch_operands = 2 : i64, tpu.core_type = #tpu.core_type<tc>, window_params = [{transform_indices = @transform_0, window_bounds = array<i64: 2, 256, 32>}, {pipeline_mode = #tpu.pipeline_mode<synchronous>, transform_indices = @transform_1, window_bounds = array<i64: 32, 128>}, {pipeline_mode = #tpu.pipeline_mode<synchronous>, transform_indices = @transform_2, window_bounds = array<i64: 1, 128>}, {pipeline_mode = #tpu.pipeline_mode<synchronous>, transform_indices = @transform_3, window_bounds = array<i64: 1, 128>}, {pipeline_mode = #tpu.pipeline_mode<synchronous>, transform_indices = @transform_4, window_bounds = array<i64: 128, 128>}, {pipeline_mode = #tpu.pipeline_mode<synchronous>, transform_indices = @transform_5, window_bounds = array<i64: 1, 128>}, {transform_indices = @transform_6, window_bounds = array<i64: 2, 128>}]} {
    %c0_i32 = arith.constant 0 : i32
    %0 = arith.cmpi eq, %arg1, %c0_i32 : i32
    %1 = arith.extui %0 : i1 to i32
    %c0_i32_0 = arith.constant 0 : i32
    %2 = arith.cmpi ne, %1, %c0_i32_0 : i32
    scf.if %2 {
      %cst_23 = arith.constant 0.000000e+00 : f32
      %38 = vector.broadcast %cst_23 : f32 to vector<2x128xf32>
      %c0_24 = arith.constant 0 : index
      %c0_25 = arith.constant 0 : index
      %39 = vector.load %arg9[%c0_24, %c0_25] : memref<2x128xf32, #tpu.memory_space<vmem>>, vector<2x128xf32>
      tpu.vector_store %arg9[%c0_24, %c0_25], %38 {strides = array<i32>} : memref<2x128xf32, #tpu.memory_space<vmem>>, vector<2x128xf32>,
      %cst_26 = arith.constant 0xFF800000 : f32
      %40 = vector.broadcast %cst_26 : f32 to vector<2x128xf32>
      %c0_27 = arith.constant 0 : index
      %c0_28 = arith.constant 0 : index
      %41 = vector.load %arg10[%c0_27, %c0_28] : memref<2x128xf32, #tpu.memory_space<vmem>>, vector<2x128xf32>
      tpu.vector_store %arg10[%c0_27, %c0_28], %40 {strides = array<i32>} : memref<2x128xf32, #tpu.memory_space<vmem>>, vector<2x128xf32>,
    } else {
    }
    %c0 = arith.constant 0 : index
    %c0_1 = arith.constant 0 : index
    %c0_2 = arith.constant 0 : index
    %3 = vector.load %arg2[%c0, %c0_1, %c0_2] : memref<2x256x32xbf16, #tpu.memory_space<vmem>>, vector<2x256x32xbf16>
    %4 = vector.shape_cast %3 : vector<2x256x32xbf16> to vector<512x32xbf16>
    %c0_3 = arith.constant 0 : index
    %c0_4 = arith.constant 0 : index
    %5 = vector.load %arg3[%c0_3, %c0_4] : memref<32x128xbf16, #tpu.memory_space<vmem>>, vector<32x128xbf16>
    %cst = arith.constant dense<0.000000e+00> : vector<512x128xf32>
    %6 = tpu.matmul %4, %5, %cst {dimension_numbers = #tpu.dot_dimension_numbers<[1], [0], [0], [1], [0, 0, 1, 1], [], []>} : vector<512x32xbf16>, vector<32x128xbf16>, vector<512x128xf32> -> vector<512x128xf32>
    %c0_5 = arith.constant 0 : index
    %c0_6 = arith.constant 0 : index
    %7 = vector.load %arg4[%c0_5, %c0_6] : memref<1x128xf32, #tpu.memory_space<vmem>>, vector<1x128xf32>
    %8 = vector.broadcast %7 : vector<1x128xf32> to vector<512x128xf32>
    %9 = arith.mulf %6, %8 : vector<512x128xf32>
    %c0_7 = arith.constant 0 : index
    %c0_8 = arith.constant 0 : index
    %10 = vector.load %arg5[%c0_7, %c0_8] : memref<1x128xf32, #tpu.memory_space<vmem>>, vector<1x128xf32>
    %11 = vector.broadcast %10 : vector<1x128xf32> to vector<512x128xf32>
    %12 = arith.addf %9, %11 : vector<512x128xf32>
    %cst_9 = arith.constant 0.000000e+00 : f32
    %13 = vector.broadcast %cst_9 : f32 to vector<512x128xf32>
    %14 = arith.maximumf %12, %13 : vector<512x128xf32>
    %15 = tpu.iota {dimensions = array<i32: 1>} : vector<2x512xi32>
    %16 = tpu.iota {dimensions = array<i32: 0>} : vector<2x512xi32>
    %c256_i32 = arith.constant 256 : i32
    %17 = vector.broadcast %c256_i32 : i32 to vector<2x512xi32>
    %18 = arith.muli %16, %17 : vector<2x512xi32>
    %19 = arith.cmpi sge, %15, %18 : vector<2x512xi32>
    %c256_i32_10 = arith.constant 256 : i32
    %20 = vector.broadcast %c256_i32_10 : i32 to vector<2x512xi32>
    %21 = arith.addi %18, %20 : vector<2x512xi32>
    %22 = arith.cmpi slt, %15, %21 : vector<2x512xi32>
    %23 = arith.andi %19, %22 : vector<2x512xi1>
    %24 = arith.extui %23 : vector<2x512xi1> to vector<2x512xi32>
    %25 = arith.sitofp %24 : vector<2x512xi32> to vector<2x512xf32>
    %c0_11 = arith.constant 0 : index
    %c0_12 = arith.constant 0 : index
    %26 = vector.load %arg9[%c0_11, %c0_12] : memref<2x128xf32, #tpu.memory_space<vmem>>, vector<2x128xf32>
    %cst_13 = arith.constant dense<0.000000e+00> : vector<2x128xf32>
    %27 = tpu.matmul %25, %14, %cst_13 {dimension_numbers = #tpu.dot_dimension_numbers<[1], [0], [0], [1], [0, 0, 1, 1], [], []>} : vector<2x512xf32>, vector<512x128xf32>, vector<2x128xf32> -> vector<2x128xf32>
    %28 = arith.addf %26, %27 : vector<2x128xf32>
    %c0_14 = arith.constant 0 : index
    %c0_15 = arith.constant 0 : index
    %29 = vector.load %arg9[%c0_14, %c0_15] : memref<2x128xf32, #tpu.memory_space<vmem>>, vector<2x128xf32>
    tpu.vector_store %arg9[%c0_14, %c0_15], %28 {strides = array<i32>} : memref<2x128xf32, #tpu.memory_space<vmem>>, vector<2x128xf32>,
    %30 = vector.shape_cast %14 : vector<512x128xf32> to vector<2x256x128xf32>
    %c0_16 = arith.constant 0 : index
    %c0_17 = arith.constant 0 : index
    %31 = vector.load %arg10[%c0_16, %c0_17] : memref<2x128xf32, #tpu.memory_space<vmem>>, vector<2x128xf32>
    %cst_18 = arith.constant dense<0xFF800000> : vector<2x128xf32>
    %32 = vector.multi_reduction <maximumf>, %30, %cst_18 [1] : vector<2x256x128xf32> to vector<2x128xf32>
    %33 = arith.maximumf %31, %32 : vector<2x128xf32>
    %c0_19 = arith.constant 0 : index
    %c0_20 = arith.constant 0 : index
    %34 = vector.load %arg10[%c0_19, %c0_20] : memref<2x128xf32, #tpu.memory_space<vmem>>, vector<2x128xf32>
    tpu.vector_store %arg10[%c0_19, %c0_20], %33 {strides = array<i32>} : memref<2x128xf32, #tpu.memory_space<vmem>>, vector<2x128xf32>,
    %c0_i32_21 = arith.constant 0 : i32
    %35 = arith.cmpi eq, %arg1, %c0_i32_21 : i32
    %36 = arith.extui %35 : i1 to i32
    %c0_i32_22 = arith.constant 0 : i32
    %37 = arith.cmpi ne, %36, %c0_i32_22 : i32
    scf.if %37 {
      %c0_23 = arith.constant 0 : index
      %c0_24 = arith.constant 0 : index
      %38 = vector.load %arg9[%c0_23, %c0_24] : memref<2x128xf32, #tpu.memory_space<vmem>>, vector<2x128xf32>
      %cst_25 = arith.constant 3.906250e-03 : f32
      %39 = vector.broadcast %cst_25 : f32 to vector<2x128xf32>
      %40 = arith.mulf %38, %39 : vector<2x128xf32>
      %c0_26 = arith.constant 0 : index
      %c0_27 = arith.constant 0 : index
      %41 = vector.load %arg10[%c0_26, %c0_27] : memref<2x128xf32, #tpu.memory_space<vmem>>, vector<2x128xf32>
      %42 = arith.addf %40, %41 : vector<2x128xf32>
      %c0_28 = arith.constant 0 : index
      %c0_29 = arith.constant 0 : index
      %43 = vector.load %arg6[%c0_28, %c0_29] : memref<128x128xf32, #tpu.memory_space<vmem>>, vector<128x128xf32>
      %cst_30 = arith.constant dense<0.000000e+00> : vector<2x128xf32>
      %44 = tpu.matmul %42, %43, %cst_30 {dimension_numbers = #tpu.dot_dimension_numbers<[1], [0], [0], [1], [0, 0, 1, 1], [], []>} : vector<2x128xf32>, vector<128x128xf32>, vector<2x128xf32> -> vector<2x128xf32>
      %c0_31 = arith.constant 0 : index
      %c0_32 = arith.constant 0 : index
      %45 = vector.load %arg7[%c0_31, %c0_32] : memref<1x128xf32, #tpu.memory_space<vmem>>, vector<1x128xf32>
      %46 = vector.broadcast %45 : vector<1x128xf32> to vector<2x128xf32>
      %47 = arith.addf %44, %46 : vector<2x128xf32>
      %48 = arith.mulf %47, %47 : vector<2x128xf32>
      %cst_33 = arith.constant dense<0.000000e+00> : vector<2xf32>
      %49 = vector.multi_reduction <add>, %48, %cst_33 [1] : vector<2x128xf32> to vector<2xf32>
      %50 = vector.shape_cast %49 : vector<2xf32> to vector<2x1xf32>
      %cst_34 = arith.constant 1.000000e-24 : f32
      %51 = vector.broadcast %cst_34 : f32 to vector<2x1xf32>
      %52 = arith.maximumf %50, %51 : vector<2x1xf32>
      %53 = math.rsqrt %52 : vector<2x1xf32>
      %54 = vector.broadcast %53 : vector<2x1xf32> to vector<2x128xf32>
      %55 = arith.mulf %47, %54 : vector<2x128xf32>
      %c0_35 = arith.constant 0 : index
      %c0_36 = arith.constant 0 : index
      %56 = vector.load %arg8[%c0_35, %c0_36] : memref<2x128xf32, #tpu.memory_space<vmem>>, vector<2x128xf32>
      tpu.vector_store %arg8[%c0_35, %c0_36], %55 {strides = array<i32>} : memref<2x128xf32, #tpu.memory_space<vmem>>, vector<2x128xf32>,
    } else {
    }
    return
  }
  func.func @transform_0(%arg0: i32, %arg1: i32) -> (i32, i32, i32) {
    %c0_i32 = arith.constant 0 : i32
    %c0_i32_0 = arith.constant 0 : i32
    return %arg0, %arg1, %c0_i32 : i32, i32, i32
  }
  func.func @transform_1(%arg0: i32, %arg1: i32) -> (i32, i32) {
    %c0_i32 = arith.constant 0 : i32
    %c0_i32_0 = arith.constant 0 : i32
    %c0_i32_1 = arith.constant 0 : i32
    return %c0_i32, %c0_i32_0 : i32, i32
  }
  func.func @transform_2(%arg0: i32, %arg1: i32) -> (i32, i32) {
    %c0_i32 = arith.constant 0 : i32
    %c0_i32_0 = arith.constant 0 : i32
    %c0_i32_1 = arith.constant 0 : i32
    return %c0_i32, %c0_i32_0 : i32, i32
  }
  func.func @transform_3(%arg0: i32, %arg1: i32) -> (i32, i32) {
    %c0_i32 = arith.constant 0 : i32
    %c0_i32_0 = arith.constant 0 : i32
    %c0_i32_1 = arith.constant 0 : i32
    return %c0_i32, %c0_i32_0 : i32, i32
  }
  func.func @transform_4(%arg0: i32, %arg1: i32) -> (i32, i32) {
    %c0_i32 = arith.constant 0 : i32
    %c0_i32_0 = arith.constant 0 : i32
    %c0_i32_1 = arith.constant 0 : i32
    return %c0_i32, %c0_i32_0 : i32, i32
  }
  func.func @transform_5(%arg0: i32, %arg1: i32) -> (i32, i32) {
    %c0_i32 = arith.constant 0 : i32
    %c0_i32_0 = arith.constant 0 : i32
    %c0_i32_1 = arith.constant 0 : i32
    return %c0_i32, %c0_i32_0 : i32, i32
  }
  func.func @transform_6(%arg0: i32, %arg1: i32) -> (i32, i32) {
    %c0_i32 = arith.constant 0 : i32
    %c0_i32_0 = arith.constant 0 : i32
    return %arg0, %c0_i32 : i32, i32
  }
}

</mosaic_0001>

<llo_original>
// kernel: network_forward.1
$region0: #{network_forward.1}
  #allocation0 [shape = 'u32[]', space=smem, size = 0x4, offset = 0x4, fixed_abs, tag = 'smem constant byte address 0x4 - core index']
  #allocation1 [shape = 'u32[144,128]{1,0:T(1,128)}', space=vmem, size = 0x12000, scoped, tag = 'internal scratch']
  #allocation2 [shape = 'f32[2,128]{1,0:T(2,128)}', space=vmem, size = 0x400, scoped, tag = 'scratch operand']
  #allocation3 [shape = 'f32[2,128]{1,0:T(2,128)}', space=vmem, size = 0x400, scoped, tag = 'scratch operand']
  %s0 = inlined_call_operand.vmem [shape: bf16[2,256,32], index: 0, kind: input, shape index: {}]
  %s1 = inlined_call_operand.vmem [shape: bf16[32,128], index: 1, kind: input, shape index: {}]
  %s2 = inlined_call_operand.vmem [shape: f32[1,128], index: 2, kind: input, shape index: {}]
  %s3 = inlined_call_operand.vmem [shape: f32[1,128], index: 3, kind: input, shape index: {}]
  %s4 = inlined_call_operand.vmem [shape: f32[128,128], index: 4, kind: input, shape index: {}]
  %s5 = inlined_call_operand.vmem [shape: f32[1,128], index: 5, kind: input, shape index: {}]
  %s6 = inlined_call_operand.hbm [shape: f32[2,128], index: 6, kind: output, shape index: {}]
  %s7 = sld [smem:[#allocation0]]
  $region42: #{network_forward.1} parent=0
    _
  %s9 = ssub.s32 1, %s7
  %s10 = scalar_select 0, %s9, %s7
  $region1: #{network_forward.1} parent=0
    #allocation4 [shape = 'u8[1024]{0}', space=vmem, size = 0x400, scoped, tag = 'output window, operand 0, single buffered']
    #allocation5 [shape = 's32[1]{0}', space=sflag, size = 0x4, scoped, tag = 'scoped memory for network_forward.1']
    %11 = vsyncpa [#allocation5], 0
    // Predicated region
    $region2: #{network_forward.1} parent=1 // pred_check
      _
    $region3: #{network_forward.1} parent=1 // pred_check_branch
      %13 = sbr.rel (0) target = $region5
    $region4: #{network_forward.1} parent=1 // pred_region
      _
    $region5: #{network_forward.1} parent=1 // pred_fallthru
      _
    // Predicated region
    $region6: #{network_forward.1} parent=1 // pred_check
      _
    $region7: #{network_forward.1} parent=1 // pred_check_branch
      %15 = sbr.rel (0) target = $region9
    $region8: #{network_forward.1} parent=1 // pred_region
      _
    $region9: #{network_forward.1} parent=1 // pred_fallthru
      _
    // Predicated region
    $region10: #{network_forward.1} parent=1 // pred_check
      _
    $region11: #{network_forward.1} parent=1 // pred_check_branch
      %17 = sbr.rel (0) target = $region13
    $region12: #{network_forward.1} parent=1 // pred_region
      _
    $region13: #{network_forward.1} parent=1 // pred_fallthru
      _
    // Predicated region
    $region14: #{network_forward.1} parent=1 // pred_check
      _
    $region15: #{network_forward.1} parent=1 // pred_check_branch
      %19 = sbr.rel (0) target = $region17
    $region16: #{network_forward.1} parent=1 // pred_region
      _
    $region17: #{network_forward.1} parent=1 // pred_fallthru
      _
    // Predicated region
    $region18: #{network_forward.1} parent=1 // pred_check
      _
    $region19: #{network_forward.1} parent=1 // pred_check_branch
      %21 = sbr.rel (0) target = $region21
    $region20: #{network_forward.1} parent=1 // pred_region
      _
    $region21: #{network_forward.1} parent=1 // pred_fallthru
      _
    // Predicated region
    $region22: #{network_forward.1} parent=1 // pred_check
      _
    $region23: #{network_forward.1} parent=1 // pred_check_branch
      %23 = sbr.rel (0) target = $region25
    $region24: #{network_forward.1} parent=1 // pred_region
      _
    $region25: #{network_forward.1} parent=1 // pred_fallthru
      _
    %p25 = scmp.eq.s32.totalorder 0, 0
    // Predicated region
    $region26: #{network_forward.1} parent=1 // pred_check
      %p26 = pneg %p25
    $region27: #{network_forward.1} parent=1 // pred_check_branch
      %28 = sbr.rel (%p26) target = $region29
    $region28: #{network_forward.1} parent=1 // pred_region
      %29 = vst [vmem:[#allocation2] sm:$0x3] 0.0
      %30 = vst [vmem:[#allocation3] sm:$0x3] -inf
    $region29: #{network_forward.1} parent=1 // pred_fallthru
      _
    %v31 = vld [vmem:[%s0] sm:$0xf]
    %v32 = vld [vmem:[%s0 + $0x4] sm:$0xf]
    %v33 = vld [vmem:[%s0 + $0x8] sm:$0xf]
    %v34 = vld [vmem:[%s0 + $0xc] sm:$0xf]
    %v35 = vld [vmem:[%s0 + $0x10] sm:$0xf]
    %v36 = vld [vmem:[%s0 + $0x14] sm:$0xf]
    %v37 = vld [vmem:[%s0 + $0x18] sm:$0xf]
    %v38 = vld [vmem:[%s0 + $0x1c] sm:$0xf]
    %v39 = vld [vmem:[%s0 + $0x20] sm:$0xf]
    %v40 = vld [vmem:[%s0 + $0x24] sm:$0xf]
    %v41 = vld [vmem:[%s0 + $0x28] sm:$0xf]
    %v42 = vld [vmem:[%s0 + $0x2c] sm:$0xf]
    %v43 = vld [vmem:[%s0 + $0x30] sm:$0xf]
    %v44 = vld [vmem:[%s0 + $0x34] sm:$0xf]
    %v45 = vld [vmem:[%s0 + $0x38] sm:$0xf]
    %v46 = vld [vmem:[%s0 + $0x3c] sm:$0xf]
    %v47 = vld [vmem:[%s0 + $0x40] sm:$0xf]
    %v48 = vld [vmem:[%s0 + $0x44] sm:$0xf]
    %v49 = vld [vmem:[%s0 + $0x48] sm:$0xf]
    %v50 = vld [vmem:[%s0 + $0x4c] sm:$0xf]
    %v51 = vld [vmem:[%s0 + $0x50] sm:$0xf]
    %v52 = vld [vmem:[%s0 + $0x54] sm:$0xf]
    %v53 = vld [vmem:[%s0 + $0x58] sm:$0xf]
    %v54 = vld [vmem:[%s0 + $0x5c] sm:$0xf]
    %v55 = vld [vmem:[%s0 + $0x60] sm:$0xf]
    %v56 = vld [vmem:[%s0 + $0x64] sm:$0xf]
    %v57 = vld [vmem:[%s0 + $0x68] sm:$0xf]
    %v58 = vld [vmem:[%s0 + $0x6c] sm:$0xf]
    %v59 = vld [vmem:[%s0 + $0x70] sm:$0xf]
    %v60 = vld [vmem:[%s0 + $0x74] sm:$0xf]
    %v61 = vld [vmem:[%s0 + $0x78] sm:$0xf]
    %v62 = vld [vmem:[%s0 + $0x7c] sm:$0xf]
    %v63 = vld [vmem:[%s0 + $0x80] sm:$0xf]
    %v64 = vld [vmem:[%s0 + $0x84] sm:$0xf]
    %v65 = vld [vmem:[%s0 + $0x88] sm:$0xf]
    %v66 = vld [vmem:[%s0 + $0x8c] sm:$0xf]
    %v67 = vld [vmem:[%s0 + $0x90] sm:$0xf]
    %v68 = vld [vmem:[%s0 + $0x94] sm:$0xf]
    %v69 = vld [vmem:[%s0 + $0x98] sm:$0xf]
    %v70 = vld [vmem:[%s0 + $0x9c] sm:$0xf]
    %v71 = vld [vmem:[%s0 + $0xa0] sm:$0xf]
    %v72 = vld [vmem:[%s0 + $0xa4] sm:$0xf]
    %v73 = vld [vmem:[%s0 + $0xa8] sm:$0xf]
    %v74 = vld [vmem:[%s0 + $0xac] sm:$0xf]
    %v75 = vld [vmem:[%s0 + $0xb0] sm:$0xf]
    %v76 = vld [vmem:[%s0 + $0xb4] sm:$0xf]
    %v77 = vld [vmem:[%s0 + $0xb8] sm:$0xf]
    %v78 = vld [vmem:[%s0 + $0xbc] sm:$0xf]
    %v79 = vld [vmem:[%s0 + $0xc0] sm:$0xf]
    %v80 = vld [vmem:[%s0 + $0xc4] sm:$0xf]
    %v81 = vld [vmem:[%s0 + $0xc8] sm:$0xf]
    %v82 = vld [vmem:[%s0 + $0xcc] sm:$0xf]
    %v83 = vld [vmem:[%s0 + $0xd0] sm:$0xf]
    %v84 = vld [vmem:[%s0 + $0xd4] sm:$0xf]
    %v85 = vld [vmem:[%s0 + $0xd8] sm:$0xf]
    %v86 = vld [vmem:[%s0 + $0xdc] sm:$0xf]
    %v87 = vld [vmem:[%s0 + $0xe0] sm:$0xf]
    %v88 = vld [vmem:[%s0 + $0xe4] sm:$0xf]
    %v89 = vld [vmem:[%s0 + $0xe8] sm:$0xf]
    %v90 = vld [vmem:[%s0 + $0xec] sm:$0xf]
    %v91 = vld [vmem:[%s0 + $0xf0] sm:$0xf]
    %v92 = vld [vmem:[%s0 + $0xf4] sm:$0xf]
    %v93 = vld [vmem:[%s0 + $0xf8] sm:$0xf]
    %v94 = vld [vmem:[%s0 + $0xfc] sm:$0xf]
    %v95 = vld [vmem:[%s1] sm:$0xf]
    %v96 = vld [vmem:[%s1 + $0x4] sm:$0xf]
    %v97 = vld [vmem:[%s1 + $0x8] sm:$0xf]
    %v98 = vld [vmem:[%s1 + $0xc] sm:$0xf]
    %v163 = vunpack.c.l.b16 %v31
    %v164 = vunpack.c.l.b16 %v32
    %v165 = vunpack.c.l.b16 %v33
    %v166 = vunpack.c.l.b16 %v34
    %v167 = vunpack.c.l.b16 %v35
    %v168 = vunpack.c.l.b16 %v36
    %v169 = vunpack.c.l.b16 %v37
    %v170 = vunpack.c.l.b16 %v38
    %v171 = vunpack.c.l.b16 %v39
    %v172 = vunpack.c.l.b16 %v40
    %v173 = vunpack.c.l.b16 %v41
    %v174 = vunpack.c.l.b16 %v42
    %v175 = vunpack.c.l.b16 %v43
    %v176 = vunpack.c.l.b16 %v44
    %v177 = vunpack.c.l.b16 %v45
    %v178 = vunpack.c.l.b16 %v46
    %v179 = vunpack.c.l.b16 %v47
    %v180 = vunpack.c.l.b16 %v48
    %v181 = vunpack.c.l.b16 %v49
    %v182 = vunpack.c.l.b16 %v50
    %v183 = vunpack.c.l.b16 %v51
    %v184 = vunpack.c.l.b16 %v52
    %v185 = vunpack.c.l.b16 %v53
    %v186 = vunpack.c.l.b16 %v54
    %v187 = vunpack.c.l.b16 %v55
    %v188 = vunpack.c.l.b16 %v56
    %v189 = vunpack.c.l.b16 %v57
    %v190 = vunpack.c.l.b16 %v58
    %v191 = vunpack.c.l.b16 %v59
    %v192 = vunpack.c.l.b16 %v60
    %v193 = vunpack.c.l.b16 %v61
    %v194 = vunpack.c.l.b16 %v62
    %v195 = vunpack.c.l.b16 %v63
    %v196 = vunpack.c.l.b16 %v64
    %v197 = vunpack.c.l.b16 %v65
    %v198 = vunpack.c.l.b16 %v66
    %v199 = vunpack.c.l.b16 %v67
    %v200 = vunpack.c.l.b16 %v68
    %v201 = vunpack.c.l.b16 %v69
    %v202 = vunpack.c.l.b16 %v70
    %v203 = vunpack.c.l.b16 %v71
    %v204 = vunpack.c.l.b16 %v72
    %v205 = vunpack.c.l.b16 %v73
    %v206 = vunpack.c.l.b16 %v74
    %v207 = vunpack.c.l.b16 %v75
    %v208 = vunpack.c.l.b16 %v76
    %v209 = vunpack.c.l.b16 %v77
    %v210 = vunpack.c.l.b16 %v78
    %v211 = vunpack.c.l.b16 %v79
    %v212 = vunpack.c.l.b16 %v80
    %v213 = vunpack.c.l.b16 %v81
    %v214 = vunpack.c.l.b16 %v82
    %v215 = vunpack.c.l.b16 %v83
    %v216 = vunpack.c.l.b16 %v84
    %v217 = vunpack.c.l.b16 %v85
    %v218 = vunpack.c.l.b16 %v86
    %v219 = vunpack.c.l.b16 %v87
    %v220 = vunpack.c.l.b16 %v88
    %v221 = vunpack.c.l.b16 %v89
    %v222 = vunpack.c.l.b16 %v90
    %v223 = vunpack.c.l.b16 %v91
    %v224 = vunpack.c.l.b16 %v92
    %v225 = vunpack.c.l.b16 %v93
    %v226 = vunpack.c.l.b16 %v94
    %v227 = vpack.c.b16 %v164, %v163
    %v228 = vpack.c.b16 %v166, %v165
    %v229 = vpack.c.b16 %v168, %v167
    %v230 = vpack.c.b16 %v170, %v169
    %v231 = vpack.c.b16 %v172, %v171
    %v232 = vpack.c.b16 %v174, %v173
    %v233 = vpack.c.b16 %v176, %v175
    %v234 = vpack.c.b16 %v178, %v177
    %v235 = vpack.c.b16 %v180, %v179
    %v236 = vpack.c.b16 %v182, %v181
    %v237 = vpack.c.b16 %v184, %v183
    %v238 = vpack.c.b16 %v186, %v185
    %v239 = vpack.c.b16 %v188, %v187
    %v240 = vpack.c.b16 %v190, %v189
    %v241 = vpack.c.b16 %v192, %v191
    %v242 = vpack.c.b16 %v194, %v193
    %v243 = vpack.c.b16 %v196, %v195
    %v244 = vpack.c.b16 %v198, %v197
    %v245 = vpack.c.b16 %v200, %v199
    %v246 = vpack.c.b16 %v202, %v201
    %v247 = vpack.c.b16 %v204, %v203
    %v248 = vpack.c.b16 %v206, %v205
    %v249 = vpack.c.b16 %v208, %v207
    %v250 = vpack.c.b16 %v210, %v209
    %v251 = vpack.c.b16 %v212, %v211
    %v252 = vpack.c.b16 %v214, %v213
    %v253 = vpack.c.b16 %v216, %v215
    %v254 = vpack.c.b16 %v218, %v217
    %v255 = vpack.c.b16 %v220, %v219
    %v256 = vpack.c.b16 %v222, %v221
    %v257 = vpack.c.b16 %v224, %v223
    %v258 = vpack.c.b16 %v226, %v225
    %v263 = vunpack.c.l.b16 %v95
    %v264 = vunpack.c.l.b16 %v96
    %v265 = vunpack.c.l.b16 %v97
    %v266 = vunpack.c.l.b16 %v98
    %v267 = vpack.c.b16 %v264, %v263
    %v268 = vpack.c.b16 %v266, %v265
    %vm271 = vcmask 261120
    %v273 = vsel %vm271, %v227, 0
    %v276 = vsel %vm271, %v228, 0
    %v279 = vsel %vm271, %v229, 0
    %v282 = vsel %vm271, %v230, 0
    %v285 = vsel %vm271, %v231, 0
    %v288 = vsel %vm271, %v232, 0
    %v291 = vsel %vm271, %v233, 0
    %v294 = vsel %vm271, %v234, 0
    %v297 = vsel %vm271, %v235, 0
    %v300 = vsel %vm271, %v236, 0
    %v303 = vsel %vm271, %v237, 0
    %v306 = vsel %vm271, %v238, 0
    %v309 = vsel %vm271, %v239, 0
    %v312 = vsel %vm271, %v240, 0
    %v315 = vsel %vm271, %v241, 0
    %v318 = vsel %vm271, %v242, 0
    %v321 = vsel %vm271, %v243, 0
    %v324 = vsel %vm271, %v244, 0
    %v327 = vsel %vm271, %v245, 0
    %v330 = vsel %vm271, %v246, 0
    %v333 = vsel %vm271, %v247, 0
    %v336 = vsel %vm271, %v248, 0
    %v339 = vsel %vm271, %v249, 0
    %v342 = vsel %vm271, %v250, 0
    %v345 = vsel %vm271, %v251, 0
    %v348 = vsel %vm271, %v252, 0
    %v351 = vsel %vm271, %v253, 0
    %v354 = vsel %vm271, %v254, 0
    %v357 = vsel %vm271, %v255, 0
    %v360 = vsel %vm271, %v256, 0
    %v363 = vsel %vm271, %v257, 0
    %v366 = vsel %vm271, %v258, 0
    %368 = vmatprep.subr.bf16.mxu0 0
    %369 = vmatpush1.bf16.msra.mxu0 %v267
    %370 = vmatprep.subr.bf16.mxu0 0
    %371 = vmatpush1.bf16.msra.mxu0 %v268
    %372 = vmatprep.subr.bf16.mxu0 0
    %373 = vmatpush1.bf16.msra.mxu0 0
    %374 = vmatprep.subr.bf16.mxu0 0
    %375 = vmatpush1.bf16.msra.mxu0 0
    %376 = vmatprep.subr.bf16.mxu0 0
    %377 = vmatpush1.bf16.msra.mxu0 0
    %378 = vmatprep.subr.bf16.mxu0 0
    %379 = vmatpush1.bf16.msra.mxu0 0
    %380 = vmatprep.subr.bf16.mxu0 0
    %381 = vmatpush1.bf16.msra.mxu0 0
    %382 = vmatprep.subr.bf16.mxu0 0
    %383 = vmatpush1.bf16.msra.mxu0 0
    %384 = vmatprep.subr.bf16.mxu0 0
    %385 = vmatpush1.bf16.msra.mxu0 0
    %386 = vmatprep.subr.bf16.mxu0 0
    %387 = vmatpush1.bf16.msra.mxu0 0
    %388 = vmatprep.subr.bf16.mxu0 0
    %389 = vmatpush1.bf16.msra.mxu0 0
    %390 = vmatprep.subr.bf16.mxu0 0
    %391 = vmatpush1.bf16.msra.mxu0 0
    %392 = vmatprep.subr.bf16.mxu0 0
    %393 = vmatpush1.bf16.msra.mxu0 0
    %394 = vmatprep.subr.bf16.mxu0 0
    %395 = vmatpush1.bf16.msra.mxu0 0
    %396 = vmatprep.subr.bf16.mxu0 0
    %397 = vmatpush1.bf16.msra.mxu0 0
    %398 = vmatprep.subr.bf16.mxu0 0
    %399 = vmatpush1.bf16.msra.mxu0 0
    %400 = vmatprep.mubr.bf16.mxu0 0
    %401 = vmatmul.mubr.bf16.gmra.mrb[0].mxu0 %v273
    %v402 = vpop.f32.mrb[0].mxu0
    %v403 = vadd.f32 0.0, %v402
    %v404 = vpop.f32.mrb[0].mxu0
    %v405 = vpop.f32.mrb[0].mxu0
    %v406 = vadd.f32 0.0, %v405
    %v407 = vpop.f32.mrb[0].mxu0
    %408 = vmatprep.mubr.bf16.mxu0 0
    %409 = vmatmul.mubr.bf16.gmra.mrb[0].mxu0 %v276
    %v410 = vpop.f32.mrb[0].mxu0
    %v411 = vadd.f32 0.0, %v410
    %v412 = vpop.f32.mrb[0].mxu0
    %v413 = vpop.f32.mrb[0].mxu0
    %v414 = vadd.f32 0.0, %v413
    %v415 = vpop.f32.mrb[0].mxu0
    %416 = vmatprep.mubr.bf16.mxu0 0
    %417 = vmatmul.mubr.bf16.gmra.mrb[0].mxu0 %v279
    %v418 = vpop.f32.mrb[0].mxu0
    %v419 = vadd.f32 0.0, %v418
    %v420 = vpop.f32.mrb[0].mxu0
    %v421 = vpop.f32.mrb[0].mxu0
    %v422 = vadd.f32 0.0, %v421
    %v423 = vpop.f32.mrb[0].mxu0
    %424 = vmatprep.mubr.bf16.mxu0 0
    %425 = vmatmul.mubr.bf16.gmra.mrb[0].mxu0 %v282
    %v426 = vpop.f32.mrb[0].mxu0
    %v427 = vadd.f32 0.0, %v426
    %v428 = vpop.f32.mrb[0].mxu0
    %v429 = vpop.f32.mrb[0].mxu0
    %v430 = vadd.f32 0.0, %v429
    %v431 = vpop.f32.mrb[0].mxu0
    %432 = vmatprep.mubr.bf16.mxu0 0
    %433 = vmatmul.mubr.bf16.gmra.mrb[0].mxu0 %v285
    %v434 = vpop.f32.mrb[0].mxu0
    %v435 = vadd.f32 0.0, %v434
    %v436 = vpop.f32.mrb[0].mxu0
    %v437 = vpop.f32.mrb[0].mxu0
    %v438 = vadd.f32 0.0, %v437
    %v439 = vpop.f32.mrb[0].mxu0
    %440 = vmatprep.mubr.bf16.mxu0 0
    %441 = vmatmul.mubr.bf16.gmra.mrb[0].mxu0 %v288
    %v442 = vpop.f32.mrb[0].mxu0
    %v443 = vadd.f32 0.0, %v442
    %v444 = vpop.f32.mrb[0].mxu0
    %v445 = vpop.f32.mrb[0].mxu0
    %v446 = vadd.f32 0.0, %v445
    %v447 = vpop.f32.mrb[0].mxu0
    %448 = vmatprep.mubr.bf16.mxu0 0
    %449 = vmatmul.mubr.bf16.gmra.mrb[0].mxu0 %v291
    %v450 = vpop.f32.mrb[0].mxu0
    %v451 = vadd.f32 0.0, %v450
    %v452 = vpop.f32.mrb[0].mxu0
    %v453 = vpop.f32.mrb[0].mxu0
    %v454 = vadd.f32 0.0, %v453
    %v455 = vpop.f32.mrb[0].mxu0
    %456 = vmatprep.mubr.bf16.mxu0 0
    %457 = vmatmul.mubr.bf16.gmra.mrb[0].mxu0 %v294
    %v458 = vpop.f32.mrb[0].mxu0
    %v459 = vadd.f32 0.0, %v458
    %v460 = vpop.f32.mrb[0].mxu0
    %v461 = vpop.f32.mrb[0].mxu0
    %v462 = vadd.f32 0.0, %v461
    %v463 = vpop.f32.mrb[0].mxu0
    %464 = vmatprep.mubr.bf16.mxu0 0
    %465 = vmatmul.mubr.bf16.gmra.mrb[0].mxu0 %v297
    %v466 = vpop.f32.mrb[0].mxu0
    %v467 = vadd.f32 0.0, %v466
    %v468 = vpop.f32.mrb[0].mxu0
    %v469 = vpop.f32.mrb[0].mxu0
    %v470 = vadd.f32 0.0, %v469
    %v471 = vpop.f32.mrb[0].mxu0
    %472 = vmatprep.mubr.bf16.mxu0 0
    %473 = vmatmul.mubr.bf16.gmra.mrb[0].mxu0 %v300
    %v474 = vpop.f32.mrb[0].mxu0
    %v475 = vadd.f32 0.0, %v474
    %v476 = vpop.f32.mrb[0].mxu0
    %v477 = vpop.f32.mrb[0].mxu0
    %v478 = vadd.f32 0.0, %v477
    %v479 = vpop.f32.mrb[0].mxu0
    %480 = vmatprep.mubr.bf16.mxu0 0
    %481 = vmatmul.mubr.bf16.gmra.mrb[0].mxu0 %v303
    %v482 = vpop.f32.mrb[0].mxu0
    %v483 = vadd.f32 0.0, %v482
    %v484 = vpop.f32.mrb[0].mxu0
    %v485 = vpop.f32.mrb[0].mxu0
    %v486 = vadd.f32 0.0, %v485
    %v487 = vpop.f32.mrb[0].mxu0
    %488 = vmatprep.mubr.bf16.mxu0 0
    %489 = vmatmul.mubr.bf16.gmra.mrb[0].mxu0 %v306
    %v490 = vpop.f32.mrb[0].mxu0
    %v491 = vadd.f32 0.0, %v490
    %v492 = vpop.f32.mrb[0].mxu0
    %v493 = vpop.f32.mrb[0].mxu0
    %v494 = vadd.f32 0.0, %v493
    %v495 = vpop.f32.mrb[0].mxu0
    %496 = vmatprep.mubr.bf16.mxu0 0
    %497 = vmatmul.mubr.bf16.gmra.mrb[0].mxu0 %v309
    %v498 = vpop.f32.mrb[0].mxu0
    %v499 = vadd.f32 0.0, %v498
    %v500 = vpop.f32.mrb[0].mxu0
    %v501 = vpop.f32.mrb[0].mxu0
    %v502 = vadd.f32 0.0, %v501
    %v503 = vpop.f32.mrb[0].mxu0
    %504 = vmatprep.mubr.bf16.mxu0 0
    %505 = vmatmul.mubr.bf16.gmra.mrb[0].mxu0 %v312
    %v506 = vpop.f32.mrb[0].mxu0
    %v507 = vadd.f32 0.0, %v506
    %v508 = vpop.f32.mrb[0].mxu0
    %v509 = vpop.f32.mrb[0].mxu0
    %v510 = vadd.f32 0.0, %v509
    %v511 = vpop.f32.mrb[0].mxu0
    %512 = vmatprep.mubr.bf16.mxu0 0
    %513 = vmatmul.mubr.bf16.gmra.mrb[0].mxu0 %v315
    %v514 = vpop.f32.mrb[0].mxu0
    %v515 = vadd.f32 0.0, %v514
    %v516 = vpop.f32.mrb[0].mxu0
    %v517 = vpop.f32.mrb[0].mxu0
    %v518 = vadd.f32 0.0, %v517
    %v519 = vpop.f32.mrb[0].mxu0
    %520 = vmatprep.mubr.bf16.mxu0 0
    %521 = vmatmul.mubr.bf16.gmra.mrb[0].mxu0 %v318
    %v522 = vpop.f32.mrb[0].mxu0
    %v523 = vadd.f32 0.0, %v522
    %v524 = vpop.f32.mrb[0].mxu0
    %v525 = vpop.f32.mrb[0].mxu0
    %v526 = vadd.f32 0.0, %v525
    %v527 = vpop.f32.mrb[0].mxu0
    %528 = vmatprep.mubr.bf16.mxu0 0
    %529 = vmatmul.mubr.bf16.gmra.mrb[0].mxu0 %v321
    %v530 = vpop.f32.mrb[0].mxu0
    %v531 = vadd.f32 0.0, %v530
    %v532 = vpop.f32.mrb[0].mxu0
    %v533 = vpop.f32.mrb[0].mxu0
    %v534 = vadd.f32 0.0, %v533
    %v535 = vpop.f32.mrb[0].mxu0
    %536 = vmatprep.mubr.bf16.mxu0 0
    %537 = vmatmul.mubr.bf16.gmra.mrb[0].mxu0 %v324
    %v538 = vpop.f32.mrb[0].mxu0
    %v539 = vadd.f32 0.0, %v538
    %v540 = vpop.f32.mrb[0].mxu0
    %v541 = vpop.f32.mrb[0].mxu0
    %v542 = vadd.f32 0.0, %v541
    %v543 = vpop.f32.mrb[0].mxu0
    %544 = vmatprep.mubr.bf16.mxu0 0
    %545 = vmatmul.mubr.bf16.gmra.mrb[0].mxu0 %v327
    %v546 = vpop.f32.mrb[0].mxu0
    %v547 = vadd.f32 0.0, %v546
    %v548 = vpop.f32.mrb[0].mxu0
    %v549 = vpop.f32.mrb[0].mxu0
    %v550 = vadd.f32 0.0, %v549
    %v551 = vpop.f32.mrb[0].mxu0
    %552 = vmatprep.mubr.bf16.mxu0 0
    %553 = vmatmul.mubr.bf16.gmra.mrb[0].mxu0 %v330
    %v554 = vpop.f32.mrb[0].mxu0
    %v555 = vadd.f32 0.0, %v554
    %v556 = vpop.f32.mrb[0].mxu0
    %v557 = vpop.f32.mrb[0].mxu0
    %v558 = vadd.f32 0.0, %v557
    %v559 = vpop.f32.mrb[0].mxu0
    %560 = vmatprep.mubr.bf16.mxu0 0
    %561 = vmatmul.mubr.bf16.gmra.mrb[0].mxu0 %v333
    %v562 = vpop.f32.mrb[0].mxu0
    %v563 = vadd.f32 0.0, %v562
    %v564 = vpop.f32.mrb[0].mxu0
    %v565 = vpop.f32.mrb[0].mxu0
    %v566 = vadd.f32 0.0, %v565
    %v567 = vpop.f32.mrb[0].mxu0
    %568 = vmatprep.mubr.bf16.mxu0 0
    %569 = vmatmul.mubr.bf16.gmra.mrb[0].mxu0 %v336
    %v570 = vpop.f32.mrb[0].mxu0
    %v571 = vadd.f32 0.0, %v570
    %v572 = vpop.f32.mrb[0].mxu0
    %v573 = vpop.f32.mrb[0].mxu0
    %v574 = vadd.f32 0.0, %v573
    %v575 = vpop.f32.mrb[0].mxu0
    %576 = vmatprep.mubr.bf16.mxu0 0
    %577 = vmatmul.mubr.bf16.gmra.mrb[0].mxu0 %v339
    %v578 = vpop.f32.mrb[0].mxu0
    %v579 = vadd.f32 0.0, %v578
    %v580 = vpop.f32.mrb[0].mxu0
    %v581 = vpop.f32.mrb[0].mxu0
    %v582 = vadd.f32 0.0, %v581
    %v583 = vpop.f32.mrb[0].mxu0
    %584 = vmatprep.mubr.bf16.mxu0 0
    %585 = vmatmul.mubr.bf16.gmra.mrb[0].mxu0 %v342
    %v586 = vpop.f32.mrb[0].mxu0
    %v587 = vadd.f32 0.0, %v586
    %v588 = vpop.f32.mrb[0].mxu0
    %v589 = vpop.f32.mrb[0].mxu0
    %v590 = vadd.f32 0.0, %v589
    %v591 = vpop.f32.mrb[0].mxu0
    %592 = vmatprep.mubr.bf16.mxu0 0
    %593 = vmatmul.mubr.bf16.gmra.mrb[0].mxu0 %v345
    %v594 = vpop.f32.mrb[0].mxu0
    %v595 = vadd.f32 0.0, %v594
    %v596 = vpop.f32.mrb[0].mxu0
    %v597 = vpop.f32.mrb[0].mxu0
    %v598 = vadd.f32 0.0, %v597
    %v599 = vpop.f32.mrb[0].mxu0
    %600 = vmatprep.mubr.bf16.mxu0 0
    %601 = vmatmul.mubr.bf16.gmra.mrb[0].mxu0 %v348
    %v602 = vpop.f32.mrb[0].mxu0
    %v603 = vadd.f32 0.0, %v602
    %v604 = vpop.f32.mrb[0].mxu0
    %v605 = vpop.f32.mrb[0].mxu0
    %v606 = vadd.f32 0.0, %v605
    %v607 = vpop.f32.mrb[0].mxu0
    %608 = vmatprep.mubr.bf16.mxu0 0
    %609 = vmatmul.mubr.bf16.gmra.mrb[0].mxu0 %v351
    %v610 = vpop.f32.mrb[0].mxu0
    %v611 = vadd.f32 0.0, %v610
    %v612 = vpop.f32.mrb[0].mxu0
    %v613 = vpop.f32.mrb[0].mxu0
    %v614 = vadd.f32 0.0, %v613
    %v615 = vpop.f32.mrb[0].mxu0
    %616 = vmatprep.mubr.bf16.mxu0 0
    %617 = vmatmul.mubr.bf16.gmra.mrb[0].mxu0 %v354
    %v618 = vpop.f32.mrb[0].mxu0
    %v619 = vadd.f32 0.0, %v618
    %v620 = vpop.f32.mrb[0].mxu0
    %v621 = vpop.f32.mrb[0].mxu0
    %v622 = vadd.f32 0.0, %v621
    %v623 = vpop.f32.mrb[0].mxu0
    %624 = vmatprep.mubr.bf16.mxu0 0
    %625 = vmatmul.mubr.bf16.gmra.mrb[0].mxu0 %v357
    %v626 = vpop.f32.mrb[0].mxu0
    %v627 = vadd.f32 0.0, %v626
    %v628 = vpop.f32.mrb[0].mxu0
    %v629 = vpop.f32.mrb[0].mxu0
    %v630 = vadd.f32 0.0, %v629
    %v631 = vpop.f32.mrb[0].mxu0
    %632 = vmatprep.mubr.bf16.mxu0 0
    %633 = vmatmul.mubr.bf16.gmra.mrb[0].mxu0 %v360
    %v634 = vpop.f32.mrb[0].mxu0
    %v635 = vadd.f32 0.0, %v634
    %v636 = vpop.f32.mrb[0].mxu0
    %v637 = vpop.f32.mrb[0].mxu0
    %v638 = vadd.f32 0.0, %v637
    %v639 = vpop.f32.mrb[0].mxu0
    %640 = vmatprep.mubr.bf16.mxu0 0
    %641 = vmatmul.mubr.bf16.gmra.mrb[0].mxu0 %v363
    %v642 = vpop.f32.mrb[0].mxu0
    %v643 = vadd.f32 0.0, %v642
    %v644 = vpop.f32.mrb[0].mxu0
    %v645 = vpop.f32.mrb[0].mxu0
    %v646 = vadd.f32 0.0, %v645
    %v647 = vpop.f32.mrb[0].mxu0
    %648 = vmatprep.mubr.bf16.mxu0 0
    %649 = vmatmul.mubr.bf16.gmra.mrb[0].mxu0 %v366
    %v650 = vpop.f32.mrb[0].mxu0
    %v651 = vadd.f32 0.0, %v650
    %v652 = vpop.f32.mrb[0].mxu0
    %v653 = vpop.f32.mrb[0].mxu0
    %v654 = vadd.f32 0.0, %v653
    %v655 = vpop.f32.mrb[0].mxu0
    %656 = vdwg.mxu0
    %v657 = vld [vmem:[%s2] sm:$0x1]
    %v659 = vlaneseq
    %v660 = vshrl.u32 %v659, 7
    %v661 = vsub.s32 0, %v660
    %v662 = vrot.slane %v657, %v661
    %v664 = vmul.f32 %v403, %v662
    %v665 = vmul.f32 %v406, %v662
    %v666 = vmul.f32 %v411, %v662
    %v667 = vmul.f32 %v414, %v662
    %v668 = vmul.f32 %v419, %v662
    %v669 = vmul.f32 %v422, %v662
    %v670 = vmul.f32 %v427, %v662
    %v671 = vmul.f32 %v430, %v662
    %v672 = vmul.f32 %v435, %v662
    %v673 = vmul.f32 %v438, %v662
    %v674 = vmul.f32 %v443, %v662
    %v675 = vmul.f32 %v446, %v662
    %v676 = vmul.f32 %v451, %v662
    %v677 = vmul.f32 %v454, %v662
    %v678 = vmul.f32 %v459, %v662
    %v679 = vmul.f32 %v462, %v662
    %v680 = vmul.f32 %v467, %v662
    %v681 = vmul.f32 %v470, %v662
    %v682 = vmul.f32 %v475, %v662
    %v683 = vmul.f32 %v478, %v662
    %v684 = vmul.f32 %v483, %v662
    %v685 = vmul.f32 %v486, %v662
    %v686 = vmul.f32 %v491, %v662
    %v687 = vmul.f32 %v494, %v662
    %v688 = vmul.f32 %v499, %v662
    %v689 = vmul.f32 %v502, %v662
    %v690 = vmul.f32 %v507, %v662
    %v691 = vmul.f32 %v510, %v662
    %v692 = vmul.f32 %v515, %v662
    %v693 = vmul.f32 %v518, %v662
    %v694 = vmul.f32 %v523, %v662
    %v695 = vmul.f32 %v526, %v662
    %v696 = vmul.f32 %v531, %v662
    %v697 = vmul.f32 %v534, %v662
    %v698 = vmul.f32 %v539, %v662
    %v699 = vmul.f32 %v542, %v662
    %v700 = vmul.f32 %v547, %v662
    %v701 = vmul.f32 %v550, %v662
    %v702 = vmul.f32 %v555, %v662
    %v703 = vmul.f32 %v558, %v662
    %v704 = vmul.f32 %v563, %v662
    %v705 = vmul.f32 %v566, %v662
    %v706 = vmul.f32 %v571, %v662
    %v707 = vmul.f32 %v574, %v662
    %v708 = vmul.f32 %v579, %v662
    %v709 = vmul.f32 %v582, %v662
    %v710 = vmul.f32 %v587, %v662
    %v711 = vmul.f32 %v590, %v662
    %v712 = vmul.f32 %v595, %v662
    %v713 = vmul.f32 %v598, %v662
    %v714 = vmul.f32 %v603, %v662
    %v715 = vmul.f32 %v606, %v662
    %v716 = vmul.f32 %v611, %v662
    %v717 = vmul.f32 %v614, %v662
    %v718 = vmul.f32 %v619, %v662
    %v719 = vmul.f32 %v622, %v662
    %v720 = vmul.f32 %v627, %v662
    %v721 = vmul.f32 %v630, %v662
    %v722 = vmul.f32 %v635, %v662
    %v723 = vmul.f32 %v638, %v662
    %v724 = vmul.f32 %v643, %v662
    %v725 = vmul.f32 %v646, %v662
    %v726 = vmul.f32 %v651, %v662
    %v727 = vmul.f32 %v654, %v662
    %v728 = vld [vmem:[%s3] sm:$0x1]
    %v730 = vlaneseq
    %v731 = vshrl.u32 %v730, 7
    %v732 = vsub.s32 0, %v731
    %v733 = vrot.slane %v728, %v732
    %v735 = vadd.f32 %v664, %v733
    %v736 = vadd.f32 %v665, %v733
    %v737 = vadd.f32 %v666, %v733
    %v738 = vadd.f32 %v667, %v733
    %v739 = vadd.f32 %v668, %v733
    %v740 = vadd.f32 %v669, %v733
    %v741 = vadd.f32 %v670, %v733
    %v742 = vadd.f32 %v671, %v733
    %v743 = vadd.f32 %v672, %v733
    %v744 = vadd.f32 %v673, %v733
    %v745 = vadd.f32 %v674, %v733
    %v746 = vadd.f32 %v675, %v733
    %v747 = vadd.f32 %v676, %v733
    %v748 = vadd.f32 %v677, %v733
    %v749 = vadd.f32 %v678, %v733
    %v750 = vadd.f32 %v679, %v733
    %v751 = vadd.f32 %v680, %v733
    %v752 = vadd.f32 %v681, %v733
    %v753 = vadd.f32 %v682, %v733
    %v754 = vadd.f32 %v683, %v733
    %v755 = vadd.f32 %v684, %v733
    %v756 = vadd.f32 %v685, %v733
    %v757 = vadd.f32 %v686, %v733
    %v758 = vadd.f32 %v687, %v733
    %v759 = vadd.f32 %v688, %v733
    %v760 = vadd.f32 %v689, %v733
    %v761 = vadd.f32 %v690, %v733
    %v762 = vadd.f32 %v691, %v733
    %v763 = vadd.f32 %v692, %v733
    %v764 = vadd.f32 %v693, %v733
    %v765 = vadd.f32 %v694, %v733
    %v766 = vadd.f32 %v695, %v733
    %v767 = vadd.f32 %v696, %v733
    %v768 = vadd.f32 %v697, %v733
    %v769 = vadd.f32 %v698, %v733
    %v770 = vadd.f32 %v699, %v733
    %v771 = vadd.f32 %v700, %v733
    %v772 = vadd.f32 %v701, %v733
    %v773 = vadd.f32 %v702, %v733
    %v774 = vadd.f32 %v703, %v733
    %v775 = vadd.f32 %v704, %v733
    %v776 = vadd.f32 %v705, %v733
    %v777 = vadd.f32 %v706, %v733
    %v778 = vadd.f32 %v707, %v733
    %v779 = vadd.f32 %v708, %v733
    %v780 = vadd.f32 %v709, %v733
    %v781 = vadd.f32 %v710, %v733
    %v782 = vadd.f32 %v711, %v733
    %v783 = vadd.f32 %v712, %v733
    %v784 = vadd.f32 %v713, %v733
    %v785 = vadd.f32 %v714, %v733
    %v786 = vadd.f32 %v715, %v733
    %v787 = vadd.f32 %v716, %v733
    %v788 = vadd.f32 %v717, %v733
    %v789 = vadd.f32 %v718, %v733
    %v790 = vadd.f32 %v719, %v733
    %v791 = vadd.f32 %v720, %v733
    %v792 = vadd.f32 %v721, %v733
    %v793 = vadd.f32 %v722, %v733
    %v794 = vadd.f32 %v723, %v733
    %v795 = vadd.f32 %v724, %v733
    %v796 = vadd.f32 %v725, %v733
    %v797 = vadd.f32 %v726, %v733
    %v798 = vadd.f32 %v727, %v733
    %v799 = vmax.f32 %v735, 0.0
    %v800 = vmax.f32 %v736, 0.0
    %v801 = vmax.f32 %v737, 0.0
    %v802 = vmax.f32 %v738, 0.0
    %v803 = vmax.f32 %v739, 0.0
    %v804 = vmax.f32 %v740, 0.0
    %v805 = vmax.f32 %v741, 0.0
    %v806 = vmax.f32 %v742, 0.0
    %v807 = vmax.f32 %v743, 0.0
    %v808 = vmax.f32 %v744, 0.0
    %v809 = vmax.f32 %v745, 0.0
    %v810 = vmax.f32 %v746, 0.0
    %v811 = vmax.f32 %v747, 0.0
    %v812 = vmax.f32 %v748, 0.0
    %v813 = vmax.f32 %v749, 0.0
    %v814 = vmax.f32 %v750, 0.0
    %v815 = vmax.f32 %v751, 0.0
    %v816 = vmax.f32 %v752, 0.0
    %v817 = vmax.f32 %v753, 0.0
    %v818 = vmax.f32 %v754, 0.0
    %v819 = vmax.f32 %v755, 0.0
    %v820 = vmax.f32 %v756, 0.0
    %v821 = vmax.f32 %v757, 0.0
    %v822 = vmax.f32 %v758, 0.0
    %v823 = vmax.f32 %v759, 0.0
    %v824 = vmax.f32 %v760, 0.0
    %v825 = vmax.f32 %v761, 0.0
    %v826 = vmax.f32 %v762, 0.0
    %v827 = vmax.f32 %v763, 0.0
    %v828 = vmax.f32 %v764, 0.0
    %v829 = vmax.f32 %v765, 0.0
    %v830 = vmax.f32 %v766, 0.0
    %v831 = vmax.f32 %v767, 0.0
    %v832 = vmax.f32 %v768, 0.0
    %v833 = vmax.f32 %v769, 0.0
    %v834 = vmax.f32 %v770, 0.0
    %v835 = vmax.f32 %v771, 0.0
    %v836 = vmax.f32 %v772, 0.0
    %v837 = vmax.f32 %v773, 0.0
    %v838 = vmax.f32 %v774, 0.0
    %v839 = vmax.f32 %v775, 0.0
    %v840 = vmax.f32 %v776, 0.0
    %v841 = vmax.f32 %v777, 0.0
    %v842 = vmax.f32 %v778, 0.0
    %v843 = vmax.f32 %v779, 0.0
    %v844 = vmax.f32 %v780, 0.0
    %v845 = vmax.f32 %v781, 0.0
    %v846 = vmax.f32 %v782, 0.0
    %v847 = vmax.f32 %v783, 0.0
    %v848 = vmax.f32 %v784, 0.0
    %v849 = vmax.f32 %v785, 0.0
    %v850 = vmax.f32 %v786, 0.0
    %v851 = vmax.f32 %v787, 0.0
    %v852 = vmax.f32 %v788, 0.0
    %v853 = vmax.f32 %v789, 0.0
    %v854 = vmax.f32 %v790, 0.0
    %v855 = vmax.f32 %v791, 0.0
    %v856 = vmax.f32 %v792, 0.0
    %v857 = vmax.f32 %v793, 0.0
    %v858 = vmax.f32 %v794, 0.0
    %v859 = vmax.f32 %v795, 0.0
    %v860 = vmax.f32 %v796, 0.0
    %v861 = vmax.f32 %v797, 0.0
    %v862 = vmax.f32 %v798, 0.0
    %v863 = vlaneseq
    %v864 = vand.u32 %v863, 127
    %v865 = vadd.s32 %v864, 128
    %v866 = vadd.s32 %v864, 256
    %v867 = vadd.s32 %v864, 384
    %v868 = vlaneseq
    %v869 = vshrl.u32 %v868, 7
    %v870 = vmul.u32 %v869, 256
    %vm871 = vcmp.ge.s32.totalorder %v864, %v870
    %vm872 = vcmp.ge.s32.totalorder %v865, %v870
    %vm873 = vcmp.ge.s32.totalorder %v866, %v870
    %vm874 = vcmp.ge.s32.totalorder %v867, %v870
    %v875 = vadd.s32 %v870, 256
    %vm876 = vcmp.lt.s32.totalorder %v864, %v875
    %vm877 = vcmp.lt.s32.totalorder %v865, %v875
    %vm878 = vcmp.lt.s32.totalorder %v866, %v875
    %vm879 = vcmp.lt.s32.totalorder %v867, %v875
    %vm880 = vmand %vm871, %vm876
    %vm881 = vmand %vm872, %vm877
    %vm882 = vmand %vm873, %vm878
    %vm883 = vmand %vm874, %vm879
    %v884 = vsel %vm880, 1, 0
    %v885 = vsel %vm881, 1, 0
    %v886 = vsel %vm882, 1, 0
    %v887 = vsel %vm883, 1, 0
    %v888 = vcvt.s32.f32 %v884
    %v889 = vcvt.s32.f32 %v885
    %v890 = vcvt.s32.f32 %v886
    %v891 = vcvt.s32.f32 %v887
    %v892 = vld [vmem:[#allocation2] sm:$0x3]
    %893 = vmatprep.subr.mxu0 0.0
    %894 = vmatpush1.msra.mxu0 %v799
    %895 = vmatprep.subr.mxu0 0.0
    %896 = vmatpush1.msra.mxu0 %v800
    %897 = vmatprep.subr.mxu0 0.0
    %898 = vmatpush1.msra.mxu0 %v801
    %899 = vmatprep.subr.mxu0 0.0
    %900 = vmatpush1.msra.mxu0 %v802
    %901 = vmatprep.subr.mxu0 0.0
    %902 = vmatpush1.msra.mxu0 %v803
    %903 = vmatprep.subr.mxu0 0.0
    %904 = vmatpush1.msra.mxu0 %v804
    %905 = vmatprep.subr.mxu0 0.0
    %906 = vmatpush1.msra.mxu0 %v805
    %907 = vmatprep.subr.mxu0 0.0
    %908 = vmatpush1.msra.mxu0 %v806
    %909 = vmatprep.subr.mxu0 0.0
    %910 = vmatpush1.msra.mxu0 %v807
    %911 = vmatprep.subr.mxu0 0.0
    %912 = vmatpush1.msra.mxu0 %v808
    %913 = vmatprep.subr.mxu0 0.0
    %914 = vmatpush1.msra.mxu0 %v809
    %915 = vmatprep.subr.mxu0 0.0
    %916 = vmatpush1.msra.mxu0 %v810
    %917 = vmatprep.subr.mxu0 0.0
    %918 = vmatpush1.msra.mxu0 %v811
    %919 = vmatprep.subr.mxu0 0.0
    %920 = vmatpush1.msra.mxu0 %v812
    %921 = vmatprep.subr.mxu0 0.0
    %922 = vmatpush1.msra.mxu0 %v813
    %923 = vmatprep.subr.mxu0 0.0
    %924 = vmatpush1.msra.mxu0 %v814
    %925 = vmatprep.subr.mxu0 0.0
    %926 = vmatpush1.msra.mxu0 %v815
    %927 = vmatprep.subr.mxu0 0.0
    %928 = vmatpush1.msra.mxu0 %v816
    %929 = vmatprep.subr.mxu0 0.0
    %930 = vmatpush1.msra.mxu0 %v817
    %931 = vmatprep.subr.mxu0 0.0
    %932 = vmatpush1.msra.mxu0 %v818
    %933 = vmatprep.subr.mxu0 0.0
    %934 = vmatpush1.msra.mxu0 %v819
    %935 = vmatprep.subr.mxu0 0.0
    %936 = vmatpush1.msra.mxu0 %v820
    %937 = vmatprep.subr.mxu0 0.0
    %938 = vmatpush1.msra.mxu0 %v821
    %939 = vmatprep.subr.mxu0 0.0
    %940 = vmatpush1.msra.mxu0 %v822
    %941 = vmatprep.subr.mxu0 0.0
    %942 = vmatpush1.msra.mxu0 %v823
    %943 = vmatprep.subr.mxu0 0.0
    %944 = vmatpush1.msra.mxu0 %v824
    %945 = vmatprep.subr.mxu0 0.0
    %946 = vmatpush1.msra.mxu0 %v825
    %947 = vmatprep.subr.mxu0 0.0
    %948 = vmatpush1.msra.mxu0 %v826
    %949 = vmatprep.subr.mxu0 0.0
    %950 = vmatpush1.msra.mxu0 %v827
    %951 = vmatprep.subr.mxu0 0.0
    %952 = vmatpush1.msra.mxu0 %v828
    %953 = vmatprep.subr.mxu0 0.0
    %954 = vmatpush1.msra.mxu0 %v829
    %955 = vmatprep.subr.mxu0 0.0
    %956 = vmatpush1.msra.mxu0 %v830
    %957 = vmatprep.mubr.f32.mxu0 %v889
    %958 = vmatmul.mubr.f32.gmra.mrb[0].mxu0 %v888
    %v959 = vpop.f32.mrb[0].mxu0
    %v960 = vadd.f32 0.0, %v959
    %v961 = vpop.f32.mrb[0].mxu0
    %962 = vdwg.mxu0
    %963 = vmatprep.subr.mxu0 0.0
    %964 = vmatpush1.msra.mxu0 %v831
    %965 = vmatprep.subr.mxu0 0.0
    %966 = vmatpush1.msra.mxu0 %v832
    %967 = vmatprep.subr.mxu0 0.0
    %968 = vmatpush1.msra.mxu0 %v833
    %969 = vmatprep.subr.mxu0 0.0
    %970 = vmatpush1.msra.mxu0 %v834
    %971 = vmatprep.subr.mxu0 0.0
    %972 = vmatpush1.msra.mxu0 %v835
    %973 = vmatprep.subr.mxu0 0.0
    %974 = vmatpush1.msra.mxu0 %v836
    %975 = vmatprep.subr.mxu0 0.0
    %976 = vmatpush1.msra.mxu0 %v837
    %977 = vmatprep.subr.mxu0 0.0
    %978 = vmatpush1.msra.mxu0 %v838
    %979 = vmatprep.subr.mxu0 0.0
    %980 = vmatpush1.msra.mxu0 %v839
    %981 = vmatprep.subr.mxu0 0.0
    %982 = vmatpush1.msra.mxu0 %v840
    %983 = vmatprep.subr.mxu0 0.0
    %984 = vmatpush1.msra.mxu0 %v841
    %985 = vmatprep.subr.mxu0 0.0
    %986 = vmatpush1.msra.mxu0 %v842
    %987 = vmatprep.subr.mxu0 0.0
    %988 = vmatpush1.msra.mxu0 %v843
    %989 = vmatprep.subr.mxu0 0.0
    %990 = vmatpush1.msra.mxu0 %v844
    %991 = vmatprep.subr.mxu0 0.0
    %992 = vmatpush1.msra.mxu0 %v845
    %993 = vmatprep.subr.mxu0 0.0
    %994 = vmatpush1.msra.mxu0 %v846
    %995 = vmatprep.subr.mxu0 0.0
    %996 = vmatpush1.msra.mxu0 %v847
    %997 = vmatprep.subr.mxu0 0.0
    %998 = vmatpush1.msra.mxu0 %v848
    %999 = vmatprep.subr.mxu0 0.0
    %1000 = vmatpush1.msra.mxu0 %v849
    %1001 = vmatprep.subr.mxu0 0.0
    %1002 = vmatpush1.msra.mxu0 %v850
    %1003 = vmatprep.subr.mxu0 0.0
    %1004 = vmatpush1.msra.mxu0 %v851
    %1005 = vmatprep.subr.mxu0 0.0
    %1006 = vmatpush1.msra.mxu0 %v852
    %1007 = vmatprep.subr.mxu0 0.0
    %1008 = vmatpush1.msra.mxu0 %v853
    %1009 = vmatprep.subr.mxu0 0.0
    %1010 = vmatpush1.msra.mxu0 %v854
    %1011 = vmatprep.subr.mxu0 0.0
    %1012 = vmatpush1.msra.mxu0 %v855
    %1013 = vmatprep.subr.mxu0 0.0
    %1014 = vmatpush1.msra.mxu0 %v856
    %1015 = vmatprep.subr.mxu0 0.0
    %1016 = vmatpush1.msra.mxu0 %v857
    %1017 = vmatprep.subr.mxu0 0.0
    %1018 = vmatpush1.msra.mxu0 %v858
    %1019 = vmatprep.subr.mxu0 0.0
    %1020 = vmatpush1.msra.mxu0 %v859
    %1021 = vmatprep.subr.mxu0 0.0
    %1022 = vmatpush1.msra.mxu0 %v860
    %1023 = vmatprep.subr.mxu0 0.0
    %1024 = vmatpush1.msra.mxu0 %v861
    %1025 = vmatprep.subr.mxu0 0.0
    %1026 = vmatpush1.msra.mxu0 %v862
    %1027 = vmatprep.mubr.f32.mxu0 %v891
    %1028 = vmatmul.mubr.f32.gmra.mrb[0].mxu0 %v890
    %v1029 = vpop.f32.mrb[0].mxu0
    %v1030 = vadd.f32 %v960, %v1029
    %v1031 = vpop.f32.mrb[0].mxu0
    %1032 = vdwg.mxu0
    %v1033 = vadd.f32 %v892, %v1030
    %1034 = vst [vmem:[#allocation2] sm:$0x3] %v1033
    %v1035 = vld [vmem:[#allocation3] sm:$0x3]
    %v1036 = vmax.f32 %v799, %v801
    %v1037 = vmax.f32 %v800, %v802
    %v1038 = vmax.f32 %v1036, %v803
    %v1039 = vmax.f32 %v1037, %v804
    %v1040 = vmax.f32 %v1038, %v805
    %v1041 = vmax.f32 %v1039, %v806
    %v1042 = vmax.f32 %v1040, %v807
    %v1043 = vmax.f32 %v1041, %v808
    %v1044 = vmax.f32 %v1042, %v809
    %v1045 = vmax.f32 %v1043, %v810
    %v1046 = vmax.f32 %v1044, %v811
    %v1047 = vmax.f32 %v1045, %v812
    %v1048 = vmax.f32 %v1046, %v813
    %v1049 = vmax.f32 %v1047, %v814
    %v1050 = vmax.f32 %v1048, %v815
    %v1051 = vmax.f32 %v1049, %v816
    %v1052 = vmax.f32 %v1050, %v817
    %v1053 = vmax.f32 %v1051, %v818
    %v1054 = vmax.f32 %v1052, %v819
    %v1055 = vmax.f32 %v1053, %v820
    %v1056 = vmax.f32 %v1054, %v821
    %v1057 = vmax.f32 %v1055, %v822
    %v1058 = vmax.f32 %v1056, %v823
    %v1059 = vmax.f32 %v1057, %v824
    %v1060 = vmax.f32 %v1058, %v825
    %v1061 = vmax.f32 %v1059, %v826
    %v1062 = vmax.f32 %v1060, %v827
    %v1063 = vmax.f32 %v1061, %v828
    %v1064 = vmax.f32 %v1062, %v829
    %v1065 = vmax.f32 %v1063, %v830
    %v1066 = vmax.f32 %v1064, %v1065
    %v1067 = vrot.slane %v1066, 4
    %v1068 = vmax.f32 %v1066, %v1067
    %v1069 = vrot.slane %v1068, 2
    %v1070 = vmax.f32 %v1068, %v1069
    %v1071 = vrot.slane %v1070, 1
    %v1072 = vmax.f32 %v1070, %v1071
    %v1073 = vmax.f32 %v831, %v833
    %v1074 = vmax.f32 %v832, %v834
    %v1075 = vmax.f32 %v1073, %v835
    %v1076 = vmax.f32 %v1074, %v836
    %v1077 = vmax.f32 %v1075, %v837
    %v1078 = vmax.f32 %v1076, %v838
    %v1079 = vmax.f32 %v1077, %v839
    %v1080 = vmax.f32 %v1078, %v840
    %v1081 = vmax.f32 %v1079, %v841
    %v1082 = vmax.f32 %v1080, %v842
    %v1083 = vmax.f32 %v1081, %v843
    %v1084 = vmax.f32 %v1082, %v844
    %v1085 = vmax.f32 %v1083, %v845
    %v1086 = vmax.f32 %v1084, %v846
    %v1087 = vmax.f32 %v1085, %v847
    %v1088 = vmax.f32 %v1086, %v848
    %v1089 = vmax.f32 %v1087, %v849
    %v1090 = vmax.f32 %v1088, %v850
    %v1091 = vmax.f32 %v1089, %v851
    %v1092 = vmax.f32 %v1090, %v852
    %v1093 = vmax.f32 %v1091, %v853
    %v1094 = vmax.f32 %v1092, %v854
    %v1095 = vmax.f32 %v1093, %v855
    %v1096 = vmax.f32 %v1094, %v856
    %v1097 = vmax.f32 %v1095, %v857
    %v1098 = vmax.f32 %v1096, %v858
    %v1099 = vmax.f32 %v1097, %v859
    %v1100 = vmax.f32 %v1098, %v860
    %v1101 = vmax.f32 %v1099, %v861
    %v1102 = vmax.f32 %v1100, %v862
    %v1103 = vmax.f32 %v1101, %v1102
    %v1104 = vrot.slane %v1103, 4
    %v1105 = vmax.f32 %v1103, %v1104
    %v1106 = vrot.slane %v1105, 2
    %v1107 = vmax.f32 %v1105, %v1106
    %v1108 = vrot.slane %v1107, 1
    %v1109 = vmax.f32 %v1107, %v1108
    %vm1112 = vcmask 1041409
    %v1113 = vsel %vm1112, %v1109, %v1072
    %v1115 = vmax.f32 %v1035, %v1113
    %1116 = vst [vmem:[#allocation3] sm:$0x3] %v1115
    // Predicated region
    $region30: #{network_forward.1} parent=1 // pred_check
      %p1117 = pneg %p25
    $region31: #{network_forward.1} parent=1 // pred_check_branch
      %1119 = sbr.rel (%p1117) target = $region33
    $region32: #{network_forward.1} parent=1 // pred_region
      %v1120 = vld [vmem:[#allocation2] sm:$0x3]
      %v1121 = vmul.f32 %v1120, 0.00390625
      %v1122 = vld [vmem:[#allocation3] sm:$0x3]
      %v1123 = vadd.f32 %v1121, %v1122
      %v1124 = vld [vmem:[%s4] sm:$0xff]
      %v1125 = vld [vmem:[%s4 + $0x8] sm:$0xff]
      %v1126 = vld [vmem:[%s4 + $0x10] sm:$0xff]
      %v1127 = vld [vmem:[%s4 + $0x18] sm:$0xff]
      %v1128 = vld [vmem:[%s4 + $0x20] sm:$0xff]
      %v1129 = vld [vmem:[%s4 + $0x28] sm:$0xff]
      %v1130 = vld [vmem:[%s4 + $0x30] sm:$0xff]
      %v1131 = vld [vmem:[%s4 + $0x38] sm:$0xff]
      %v1132 = vld [vmem:[%s4 + $0x40] sm:$0xff]
      %v1133 = vld [vmem:[%s4 + $0x48] sm:$0xff]
      %v1134 = vld [vmem:[%s4 + $0x50] sm:$0xff]
      %v1135 = vld [vmem:[%s4 + $0x58] sm:$0xff]
      %v1136 = vld [vmem:[%s4 + $0x60] sm:$0xff]
      %v1137 = vld [vmem:[%s4 + $0x68] sm:$0xff]
      %v1138 = vld [vmem:[%s4 + $0x70] sm:$0xff]
      %v1139 = vld [vmem:[%s4 + $0x78] sm:$0xff]
      %v1140 = vld [vmem:[%s5] sm:$0x1]
      %v1142 = vlaneseq
      %v1143 = vshrl.u32 %v1142, 7
      %v1144 = vsub.s32 0, %v1143
      %v1145 = vrot.slane %v1140, %v1144
      %1147 = vmatprep.subr.mxu0 0.0
      %1148 = vmatpush1.msra.mxu0 %v1124
      %1149 = vmatprep.subr.mxu0 0.0
      %1150 = vmatpush1.msra.mxu0 %v1125
      %1151 = vmatprep.subr.mxu0 0.0
      %1152 = vmatpush1.msra.mxu0 %v1126
      %1153 = vmatprep.subr.mxu0 0.0
      %1154 = vmatpush1.msra.mxu0 %v1127
      %1155 = vmatprep.subr.mxu0 0.0
      %1156 = vmatpush1.msra.mxu0 %v1128
      %1157 = vmatprep.subr.mxu0 0.0
      %1158 = vmatpush1.msra.mxu0 %v1129
      %1159 = vmatprep.subr.mxu0 0.0
      %1160 = vmatpush1.msra.mxu0 %v1130
      %1161 = vmatprep.subr.mxu0 0.0
      %1162 = vmatpush1.msra.mxu0 %v1131
      %1163 = vmatprep.subr.mxu0 0.0
      %1164 = vmatpush1.msra.mxu0 %v1132
      %1165 = vmatprep.subr.mxu0 0.0
      %1166 = vmatpush1.msra.mxu0 %v1133
      %1167 = vmatprep.subr.mxu0 0.0
      %1168 = vmatpush1.msra.mxu0 %v1134
      %1169 = vmatprep.subr.mxu0 0.0
      %1170 = vmatpush1.msra.mxu0 %v1135
      %1171 = vmatprep.subr.mxu0 0.0
      %1172 = vmatpush1.msra.mxu0 %v1136
      %1173 = vmatprep.subr.mxu0 0.0
      %1174 = vmatpush1.msra.mxu0 %v1137
      %1175 = vmatprep.subr.mxu0 0.0
      %1176 = vmatpush1.msra.mxu0 %v1138
      %1177 = vmatprep.subr.mxu0 0.0
      %1178 = vmatpush1.msra.mxu0 %v1139
      %1179 = vmatprep.subr.mxu0 0.0
      %1180 = vmatpush1.msra.mxu0 0.0
      %1181 = vmatprep.subr.mxu0 0.0
      %1182 = vmatpush1.msra.mxu0 0.0
      %1183 = vmatprep.subr.mxu0 0.0
      %1184 = vmatpush1.msra.mxu0 0.0
      %1185 = vmatprep.subr.mxu0 0.0
      %1186 = vmatpush1.msra.mxu0 0.0
      %1187 = vmatprep.subr.mxu0 0.0
      %1188 = vmatpush1.msra.mxu0 0.0
      %1189 = vmatprep.subr.mxu0 0.0
      %1190 = vmatpush1.msra.mxu0 0.0
      %1191 = vmatprep.subr.mxu0 0.0
      %1192 = vmatpush1.msra.mxu0 0.0
      %1193 = vmatprep.subr.mxu0 0.0
      %1194 = vmatpush1.msra.mxu0 0.0
      %1195 = vmatprep.subr.mxu0 0.0
      %1196 = vmatpush1.msra.mxu0 0.0
      %1197 = vmatprep.subr.mxu0 0.0
      %1198 = vmatpush1.msra.mxu0 0.0
      %1199 = vmatprep.subr.mxu0 0.0
      %1200 = vmatpush1.msra.mxu0 0.0
      %1201 = vmatprep.subr.mxu0 0.0
      %1202 = vmatpush1.msra.mxu0 0.0
      %1203 = vmatprep.subr.mxu0 0.0
      %1204 = vmatpush1.msra.mxu0 0.0
      %1205 = vmatprep.subr.mxu0 0.0
      %1206 = vmatpush1.msra.mxu0 0.0
      %1207 = vmatprep.subr.mxu0 0.0
      %1208 = vmatpush1.msra.mxu0 0.0
      %1209 = vmatprep.subr.mxu0 0.0
      %1210 = vmatpush1.msra.mxu0 0.0
      %1211 = vmatprep.mubr.f32.mxu0 0.0
      %1212 = vmatmul.mubr.f32.gmra.mrb[0].mxu0 %v1123
      %v1213 = vpop.f32.mrb[0].mxu0
      %v1214 = vadd.f32 %v1145, %v1213
      %v1215 = vpop.f32.mrb[0].mxu0
      %1216 = vdwg.mxu0
      %v1217 = vmul.f32 %v1214, %v1214
      %vm1218 = vcmask 1041408
      %v1219 = vsel %vm1218, %v1217, 0.0
      %1220 = vadd.xlane.f32.xlu0 %v1219
      %v1221 = vpop.xlane.xlu0 %1220
      %v1222 = vmax.f32 %v1221, 1e-24
      %v1223 = vrsqrt.pop %v1222
      %v1224 = vmul.f32 %v1214, %v1223
      %1225 = vst [vmem:[#allocation4] sm:$0x3] %v1224
    $region33: #{network_forward.1} parent=1 // pred_fallthru
      _
    // Predicated region
    $region34: #{network_forward.1} parent=1 // pred_check
      _
    $region35: #{network_forward.1} parent=1 // pred_check_branch
      %1227 = sbr.rel (0) target = $region37
    $region36: #{network_forward.1} parent=1 // pred_region
      %s1229 = ssub.s32 32, 32
      %1230 = vsyncadd [#allocation5], %s1229
      %s1232 = sshll.u32 [#allocation4], 4
      %s1233 = int_to_ptr.vmem [resolvable:$true] %s1232
      %1235 = dma.vmem_to_hbm [thread:$0]  %s1233, 32, %s6, [#allocation5]
    $region37: #{network_forward.1} parent=1 // pred_fallthru
      _
    // Predicated region
    $region38: #{network_forward.1} parent=1 // pred_check
      _
    $region39: #{network_forward.1} parent=1 // pred_check_branch
      %1237 = sbr.rel (0) target = $region41
    $region40: #{network_forward.1} parent=1 // pred_region
      %1238 = dma.done [#allocation5], 32
    $region41: #{network_forward.1} parent=1 // pred_fallthru
      _
    %1239 = vsyncpa [#allocation5], 1

</llo_original>
